<compile_context>
chip_gen: v6e
topology: v6e:2x2x1
jax: 0.10.0
libtpu: 0.0.40
codegen_flags: <defaults>
</compile_context>

<pallas_src>
import functools

import jax
import jax.numpy as jnp
from jax.experimental import pallas as pl
from jax.experimental.pallas import tpu as pltpu


def _round_up(x, m):
    return (x + m - 1) // m * m


def _nll_partial_kernel(pred_ref, tgt_ref, psum_ref, pcnt_ref, *,
                        true_n, tile_n, ignore_index):
    """Per-tile partial NLL sum and valid-target count.

    pred_ref: (tile_n, C) log-probs, native dtype, VMEM.
    tgt_ref : (tile_n, 1) int32 class indices, VMEM.
    psum_ref, pcnt_ref: (1, 1, 1) f32 per-tile partial outputs.
    """
    i = pl.program_id(0)
    pred = pred_ref[...]                                   # native dtype
    tgt = tgt_ref[...]                                     # (tile_n, 1) int32
    tn, c = pred.shape

    # Row validity: inside the true batch (last tile may be partial and holds
    # unspecified rows -- no wrapper padding) and not ignore_index.  Removed
    # by *select*, never multiply, so garbage / -inf / NaN cannot poison sums.
    row = jax.lax.broadcasted_iota(jnp.int32, (tn, 1), 0) + i * tile_n
    row_valid = (row < true_n) & (tgt != ignore_index)     # (tile_n, 1) bool

    # pred[r, tgt[r]]: one lane select + lane reduce in the native dtype
    # (exact -- adds zeros to one element), upcast only the (tile_n, 1) result.
    col = jax.lax.broadcasted_iota(jnp.int32, (tn, c), 1)
    picked = jnp.sum(jnp.where(col == tgt, pred, jnp.zeros_like(pred)),
                     axis=1, keepdims=True).astype(jnp.float32)
    picked = jnp.where(row_valid, picked, jnp.float32(0))  # gate on (tile_n,1)

    psum_ref[0] = jnp.sum(picked, keepdims=True)
    pcnt_ref[0] = jnp.sum(row_valid.astype(jnp.float32), keepdims=True)


def nll_loss_pallas(pred, target, *, ignore_index=-100, tile_rows=None):
    """Mean NLL loss (PyTorch nll_loss semantics) via a row-tiled Pallas kernel."""
    n, c = pred.shape
    itemsize = pred.dtype.itemsize
    pack = max(8, 32 // itemsize)        # sublane pack: 8 f32, 16 bf16, 32 int8

    # VMEM footprint of one tile row (last dim lane-padded to 128):
    #   pred: round_up(C,128)*itemsize bytes; target ((tile,1) int32): 512 B.
    per_row_vmem = _round_up(c, 128) * itemsize + 128 * 4
    if tile_rows is None:
        # Keep the double-buffered pred+target footprint around ~24 MiB.
        tile_rows = (24 * 1024 * 1024) // (2 * per_row_vmem)
    tn = max(pack, min(_round_up(tile_rows, pack), _round_up(n, pack)))
    num_tiles = (n + tn - 1) // tn

    tgt = target.astype(jnp.int32).reshape(n, 1)
    kernel = functools.partial(_nll_partial_kernel, true_n=n, tile_n=tn,
                               ignore_index=ignore_index)
    vmem_limit = int(max(2 * tn * per_row_vmem + (4 << 20), 16 << 20))

    # TODO(synk): for C < 128 a lane-folding layout (128//C rows per 128-lane
    # row) and, for vocab-sized C, a gather formulation would cut the
    # lane-padded VMEM / DMA waste further; not implemented here.
    psum, pcnt = pl.pallas_call(
        kernel,
        out_shape=(jax.ShapeDtypeStruct((num_tiles, 1, 1), jnp.float32),
                   jax.ShapeDtypeStruct((num_tiles, 1, 1), jnp.float32)),
        grid_spec=pltpu.PrefetchScalarGridSpec(
            num_scalar_prefetch=0,
            grid=(num_tiles,),
            in_specs=[
                pl.BlockSpec((tn, c), lambda i: (i, 0)),   # log-prob row tile
                pl.BlockSpec((tn, 1), lambda i: (i, 0)),   # target row tile
            ],
            out_specs=[
                pl.BlockSpec((1, 1, 1), lambda i: (i, 0, 0)),
                pl.BlockSpec((1, 1, 1), lambda i: (i, 0, 0)),
            ],
        ),
        compiler_params=pltpu.CompilerParams(
            dimension_semantics=("parallel",),   # independent tiles -> megacore
            vmem_limit_bytes=vmem_limit),
    )(pred, tgt)

    # Tiny final reduction over per-tile partials.  Matches PyTorch's
    # mean-over-valid / ignore_index semantics (0 valid targets -> NaN, same
    # as torch).
    return -jnp.sum(psum) / jnp.sum(pcnt)


def get_loss_forward(pred, target, trans_feat=None):
    # Matches get_loss.forward(pred, target, trans_feat): trans_feat is unused.
    return nll_loss_pallas(pred, target)


if __name__ == "__main__":
    key = jax.random.PRNGKey(0)
    k1, k2, k3, k4, k5, k6 = jax.random.split(key, 6)

    # Case 1: small classification batch (typical use of this module).
    N, C = 8, 16
    pred = jax.nn.log_softmax(jax.random.normal(k1, (N, C), jnp.float32), axis=-1)
    target = jax.random.randint(k2, (N,), 0, C, dtype=jnp.int32)
    trans_feat = jnp.zeros((N, 3, 3), jnp.float32)       # unused, signature parity
    loss = jax.block_until_ready(get_loss_forward(pred, target, trans_feat))
    ref = -jnp.mean(pred[jnp.arange(N), target])
    assert jnp.allclose(loss, ref, rtol=1e-5, atol=1e-6), (loss, ref)

    # Case 2: batch not a tile multiple + an ignore_index target; small tile to
    # exercise the multi-tile parallel grid and the unpadded partial last tile.
    N2, C2 = 20, 13
    pred2 = jax.nn.log_softmax(jax.random.normal(k3, (N2, C2), jnp.float32), axis=-1)
    target2 = jax.random.randint(k4, (N2,), 0, C2, dtype=jnp.int32)
    target2 = target2.at[3].set(-100)
    loss2 = jax.block_until_ready(nll_loss_pallas(pred2, target2, tile_rows=8))
    valid = target2 != -100
    picks = pred2[jnp.arange(N2), jnp.where(valid, target2, 0)]
    ref2 = -jnp.sum(jnp.where(valid, picks, 0.0)) / jnp.sum(valid)
    assert jnp.allclose(loss2, ref2, rtol=1e-5, atol=1e-6), (loss2, ref2)

    # Case 3: bf16 log-probs (exercises the no-whole-tile-upcast select path).
    N3, C3 = 24, 16
    pred3 = jax.nn.log_softmax(jax.random.normal(k5, (N3, C3), jnp.float32),
                               axis=-1).astype(jnp.bfloat16)
    target3 = jax.random.randint(k6, (N3,), 0, C3, dtype=jnp.int32)
    loss3 = jax.block_until_ready(nll_loss_pallas(pred3, target3))
    ref3 = -jnp.mean(pred3.astype(jnp.float32)[jnp.arange(N3), target3])
    assert jnp.allclose(loss3, ref3, rtol=1e-3, atol=1e-3), (loss3, ref3)

    print("KERNEL_OK")
</pallas_src>

<mosaic_0001>
module attributes {stable_mosaic.version = 11 : i64} {
  func.func @_nll_partial_kernel(%arg0: i32, %arg1: memref<8x16xf32, #tpu.memory_space<vmem>>, %arg2: memref<8x1xi32, #tpu.memory_space<vmem>>, %arg3: memref<1x1x1xf32, #tpu.memory_space<vmem>>, %arg4: memref<1x1x1xf32, #tpu.memory_space<vmem>>) attributes {dimension_semantics = [#tpu.dimension_semantics<parallel>], iteration_bounds = array<i64: 1>, scalar_prefetch = 0 : i64, scratch_operands = 0 : i64, tpu.core_type = #tpu.core_type<tc>, window_params = [{transform_indices = @transform_0, window_bounds = array<i64: 8, 16>}, {transform_indices = @transform_1, window_bounds = array<i64: 8, 1>}, {transform_indices = @transform_2, window_bounds = array<i64: 1, 1, 1>}, {transform_indices = @transform_3, window_bounds = array<i64: 1, 1, 1>}]} {
    %c0 = arith.constant 0 : index
    %c0_0 = arith.constant 0 : index
    %0 = vector.load %arg1[%c0, %c0_0] : memref<8x16xf32, #tpu.memory_space<vmem>>, vector<8x16xf32>
    %c0_1 = arith.constant 0 : index
    %c0_2 = arith.constant 0 : index
    %1 = vector.load %arg2[%c0_1, %c0_2] : memref<8x1xi32, #tpu.memory_space<vmem>>, vector<8x1xi32>
    %2 = tpu.iota {dimensions = array<i32: 0>} : vector<8x1xi32>
    %c8_i32 = arith.constant 8 : i32
    %3 = arith.muli %arg0, %c8_i32 : i32
    %4 = vector.broadcast %3 : i32 to vector<8x1xi32>
    %5 = arith.addi %2, %4 : vector<8x1xi32>
    %c8_i32_3 = arith.constant 8 : i32
    %6 = vector.broadcast %c8_i32_3 : i32 to vector<8x1xi32>
    %7 = arith.cmpi slt, %5, %6 : vector<8x1xi32>
    %c-100_i32 = arith.constant -100 : i32
    %8 = vector.broadcast %c-100_i32 : i32 to vector<8x1xi32>
    %9 = arith.cmpi ne, %1, %8 : vector<8x1xi32>
    %10 = arith.andi %7, %9 : vector<8x1xi1>
    %11 = tpu.iota {dimensions = array<i32: 1>} : vector<8x16xi32>
    %12 = vector.broadcast %1 : vector<8x1xi32> to vector<8x16xi32>
    %13 = arith.cmpi eq, %11, %12 : vector<8x16xi32>
    %cst = arith.constant 0.000000e+00 : f32
    %14 = vector.broadcast %cst : f32 to vector<8x16xf32>
    %15 = arith.select %13, %0, %14 : vector<8x16xi1>, vector<8x16xf32>
    %cst_4 = arith.constant dense<0.000000e+00> : vector<8xf32>
    %16 = vector.multi_reduction <add>, %15, %cst_4 [1] : vector<8x16xf32> to vector<8xf32>
    %17 = vector.shape_cast %16 : vector<8xf32> to vector<8x1xf32>
    %cst_5 = arith.constant 0.000000e+00 : f32
    %18 = vector.broadcast %cst_5 : f32 to vector<8x1xf32>
    %19 = arith.select %10, %17, %18 : vector<8x1xi1>, vector<8x1xf32>
    %20 = vector.shape_cast %19 : vector<8x1xf32> to vector<1x8x1xf32>
    %cst_6 = arith.constant dense<0.000000e+00> : vector<1xf32>
    %21 = vector.multi_reduction <add>, %20, %cst_6 [1, 2] : vector<1x8x1xf32> to vector<1xf32>
    %22 = vector.shape_cast %21 : vector<1xf32> to vector<1x1x1xf32>
    %23 = vector.extract %22[0, 0, 0] : f32 from vector<1x1x1xf32>
    %24 = vector.broadcast %23 : f32 to vector<1x1xf32>
    %c0_7 = arith.constant 0 : index
    %c0_8 = arith.constant 0 : index
    %c0_9 = arith.constant 0 : index
    %25 = vector.load %arg3[%c0_7, %c0_8, %c0_9] : memref<1x1x1xf32, #tpu.memory_space<vmem>>, vector<1x1x1xf32>
    %26 = vector.shape_cast %25 : vector<1x1x1xf32> to vector<1x1xf32>
    %27 = vector.shape_cast %24 : vector<1x1xf32> to vector<1x1x1xf32>
    tpu.vector_store %arg3[%c0_7, %c0_8, %c0_9], %27 {strides = array<i32>} : memref<1x1x1xf32, #tpu.memory_space<vmem>>, vector<1x1x1xf32>,
    %28 = arith.extui %10 : vector<8x1xi1> to vector<8x1xi32>
    %29 = arith.sitofp %28 : vector<8x1xi32> to vector<8x1xf32>
    %30 = vector.shape_cast %29 : vector<8x1xf32> to vector<1x8x1xf32>
    %cst_10 = arith.constant dense<0.000000e+00> : vector<1xf32>
    %31 = vector.multi_reduction <add>, %30, %cst_10 [1, 2] : vector<1x8x1xf32> to vector<1xf32>
    %32 = vector.shape_cast %31 : vector<1xf32> to vector<1x1x1xf32>
    %33 = vector.extract %32[0, 0, 0] : f32 from vector<1x1x1xf32>
    %34 = vector.broadcast %33 : f32 to vector<1x1xf32>
    %c0_11 = arith.constant 0 : index
    %c0_12 = arith.constant 0 : index
    %c0_13 = arith.constant 0 : index
    %35 = vector.load %arg4[%c0_11, %c0_12, %c0_13] : memref<1x1x1xf32, #tpu.memory_space<vmem>>, vector<1x1x1xf32>
    %36 = vector.shape_cast %35 : vector<1x1x1xf32> to vector<1x1xf32>
    %37 = vector.shape_cast %34 : vector<1x1xf32> to vector<1x1x1xf32>
    tpu.vector_store %arg4[%c0_11, %c0_12, %c0_13], %37 {strides = array<i32>} : memref<1x1x1xf32, #tpu.memory_space<vmem>>, vector<1x1x1xf32>,
    return
  }
  func.func @transform_0(%arg0: i32) -> (i32, i32) {
    %c0_i32 = arith.constant 0 : i32
    %c0_i32_0 = arith.constant 0 : i32
    return %arg0, %c0_i32 : i32, i32
  }
  func.func @transform_1(%arg0: i32) -> (i32, i32) {
    %c0_i32 = arith.constant 0 : i32
    %c0_i32_0 = arith.constant 0 : i32
    return %arg0, %c0_i32 : i32, i32
  }
  func.func @transform_2(%arg0: i32) -> (i32, i32, i32) {
    %c0_i32 = arith.constant 0 : i32
    %c0_i32_0 = arith.constant 0 : i32
    %c0_i32_1 = arith.constant 0 : i32
    return %arg0, %c0_i32, %c0_i32_0 : i32, i32, i32
  }
  func.func @transform_3(%arg0: i32) -> (i32, i32, i32) {
    %c0_i32 = arith.constant 0 : i32
    %c0_i32_0 = arith.constant 0 : i32
    %c0_i32_1 = arith.constant 0 : i32
    return %arg0, %c0_i32, %c0_i32_0 : i32, i32, i32
  }
}

</mosaic_0001>

<llo_original>
// kernel: tpu_custom_call.1
$region0: #{tpu_custom_call.1}
  #allocation0 [shape = 'u32[]', space=smem, size = 0x4, offset = 0x4, fixed_abs, tag = 'smem constant byte address 0x4 - core index']
  #allocation1 [shape = 'u32[144,128]{1,0:T(1,128)}', space=vmem, size = 0x12000, scoped, tag = 'internal scratch']
  %s0 = inlined_call_operand.vmem [shape: f32[8,16], index: 0, kind: input, shape index: {}]
  %s1 = inlined_call_operand.vmem [shape: s32[8,1], index: 1, kind: input, shape index: {}]
  %s2 = inlined_call_operand.hbm [shape: f32[1,1,1], index: 2, kind: output, shape index: {0}]
  %s3 = inlined_call_operand.hbm [shape: f32[1,1,1], index: 3, kind: output, shape index: {1}]
  %4 = xla_tuple %s2, %s3
  %s5 = sld [smem:[#allocation0]]
  $region26: #{tpu_custom_call.1} parent=0
    _
  %s7 = ssub.s32 1, %s5
  %s8 = scalar_select 0, %s7, %s5
  $region1: #{tpu_custom_call.1} parent=0
    #allocation2 [shape = 'u8[512]{0}', space=vmem, size = 0x400, scoped, tag = 'output window, operand 0, single buffered']
    #allocation3 [shape = 's32[1]{0}', space=sflag, size = 0x4, scoped, tag = 'scoped memory for tpu_custom_call.1']
    #allocation4 [shape = 'u8[512]{0}', space=vmem, size = 0x400, scoped, tag = 'output window, operand 1, single buffered']
    #allocation5 [shape = 's32[1]{0}', space=sflag, size = 0x4, scoped, tag = 'scoped memory for tpu_custom_call.1']
    %9 = vsyncpa [#allocation3], 0
    %10 = vsyncpa [#allocation5], 0
    // Predicated region
    $region2: #{tpu_custom_call.1} parent=1 // pred_check
      _
    $region3: #{tpu_custom_call.1} parent=1 // pred_check_branch
      %12 = sbr.rel (0) target = $region5
    $region4: #{tpu_custom_call.1} parent=1 // pred_region
      _
    $region5: #{tpu_custom_call.1} parent=1 // pred_fallthru
      _
    // Predicated region
    $region6: #{tpu_custom_call.1} parent=1 // pred_check
      _
    $region7: #{tpu_custom_call.1} parent=1 // pred_check_branch
      %14 = sbr.rel (0) target = $region9
    $region8: #{tpu_custom_call.1} parent=1 // pred_region
      _
    $region9: #{tpu_custom_call.1} parent=1 // pred_fallthru
      _
    %v15 = vld [vmem:[%s0] sm:$0xff]
    %v16 = vld [vmem:[%s1] sm:$0xff]
    %v17 = vlaneseq
    %v18 = vshrl.u32 %v17, 7
    %s19 = smul.u32 0, 8
    %v20 = vstv %s19
    %v21 = vadd.s32 %v18, %v20
    %vm22 = vcmp.lt.s32.totalorder %v21, 8
    %vm23 = vcmp.ne.s32.totalorder %v16, 4294967196
    %vm24 = vmand %vm22, %vm23
    %v25 = vlaneseq
    %v26 = vand.u32 %v25, 127
    %27 = vset.pattern.permute.xlu0 0
    %28 = vperm.xlu0 %27, %v16
    %v29 = vpop.permute.xlu0 %28
    %vm30 = vcmp.eq.s32.totalorder %v26, %v29
    %v31 = vsel %vm30, %v15, 0.0
    %vm32 = vcmask 130048
    %v33 = vsel %vm32, %v31, 0.0
    %34 = vadd.xlane.f32.xlu0 %v33
    %v35 = vpop.xlane.xlu0 %34
    %v36 = vsel %vm24, %v35, 0.0
    %vm37 = vcmask 7168
    %v38 = vsel %vm37, %v36, 0.0
    %39 = vadd.xlane.f32.xlu0 %v38
    %v40 = vpop.xlane.xlu0 %39
    %v41 = vrot.slane %v40, 4
    %v42 = vadd.f32 %v40, %v41
    %v43 = vrot.slane %v42, 2
    %v44 = vadd.f32 %v42, %v43
    %v45 = vrot.slane %v44, 1
    %v46 = vadd.f32 %v44, %v45
    %s47 = vtos %v46
    %v48 = vstv %s47
    %vm49 = vcmask 0
    %50 = vst.msk [vmem:[#allocation2] sm:$0x1] %vm49, %v48
    %v51 = vsel %vm24, 1, 0
    %v52 = vcvt.s32.f32 %v51
    %v53 = vsel %vm37, %v52, 0.0
    %54 = vadd.xlane.f32.xlu0 %v53
    %v55 = vpop.xlane.xlu0 %54
    %v56 = vrot.slane %v55, 4
    %v57 = vadd.f32 %v55, %v56
    %v58 = vrot.slane %v57, 2
    %v59 = vadd.f32 %v57, %v58
    %v60 = vrot.slane %v59, 1
    %v61 = vadd.f32 %v59, %v60
    %s62 = vtos %v61
    %v63 = vstv %s62
    %64 = vst.msk [vmem:[#allocation4] sm:$0x1] %vm49, %v63
    // Predicated region
    $region10: #{tpu_custom_call.1} parent=1 // pred_check
      _
    $region11: #{tpu_custom_call.1} parent=1 // pred_check_branch
      %66 = sbr.rel (0) target = $region13
    $region12: #{tpu_custom_call.1} parent=1 // pred_region
      %s68 = ssub.s32 16, 16
      %69 = vsyncadd [#allocation3], %s68
      %s71 = sshll.u32 [#allocation2], 4
      %s72 = int_to_ptr.vmem [resolvable:$true] %s71
      %74 = dma.vmem_to_hbm [thread:$0]  %s72, 16, %s2, [#allocation3]
    $region13: #{tpu_custom_call.1} parent=1 // pred_fallthru
      _
    // Predicated region
    $region14: #{tpu_custom_call.1} parent=1 // pred_check
      _
    $region15: #{tpu_custom_call.1} parent=1 // pred_check_branch
      %76 = sbr.rel (0) target = $region17
    $region16: #{tpu_custom_call.1} parent=1 // pred_region
      %s78 = ssub.s32 16, 16
      %79 = vsyncadd [#allocation5], %s78
      %s81 = sshll.u32 [#allocation4], 4
      %s82 = int_to_ptr.vmem [resolvable:$true] %s81
      %84 = dma.vmem_to_hbm [thread:$0]  %s82, 16, %s3, [#allocation5]
    $region17: #{tpu_custom_call.1} parent=1 // pred_fallthru
      _
    // Predicated region
    $region18: #{tpu_custom_call.1} parent=1 // pred_check
      _
    $region19: #{tpu_custom_call.1} parent=1 // pred_check_branch
      %86 = sbr.rel (0) target = $region21
    $region20: #{tpu_custom_call.1} parent=1 // pred_region
      %87 = dma.done [#allocation3], 16
    $region21: #{tpu_custom_call.1} parent=1 // pred_fallthru
      _
    // Predicated region
    $region22: #{tpu_custom_call.1} parent=1 // pred_check
      _
    $region23: #{tpu_custom_call.1} parent=1 // pred_check_branch
      %89 = sbr.rel (0) target = $region25
    $region24: #{tpu_custom_call.1} parent=1 // pred_region
      %90 = dma.done [#allocation5], 16
    $region25: #{tpu_custom_call.1} parent=1 // pred_fallthru
      _
    %91 = vsyncpa [#allocation3], 1
    %92 = vsyncpa [#allocation5], 1

</llo_original>
